<compile_context>
chip_gen: v7x
topology: tpu7x:2x2x1
jax: 0.10.0
libtpu: 0.0.40
codegen_flags: <defaults>
</compile_context>

<pallas_src>
import jax
import jax.numpy as jnp
from jax import lax
from jax.experimental import pallas as pl
from jax.experimental.pallas import tpu as pltpu

NUM_PATCHES = 16   # P
HIDDEN = 128       # fc output dim (fixed to 128 in the module)
TB = 8             # batch rows per grid step (one sublane tile)
NEG = -1e30        # "minus infinity" logit for padded lanes (finite, exp()->0)


def liw_kernel(sm_ref, x_ref, vecs_ref, w1_ref, w2t_ref, out_ref):
    """Fused forward of LearnableImportanceWeights for one batch tile.

    sm_ref   : SMEM (2,)       [sigma, mean]
    x_ref    : VMEM (TB, P)    per-patch score vectors
    vecs_ref : VMEM (8, H)     row 0 = b1 (fc bias, 128 wide)
                               row 1 = b2 padded: lanes <P real bias, >=P NEG
    w1_ref   : VMEM (P, H)     fc.weight.T           (in, out) lane-dense
    w2t_ref  : VMEM (H, H)     output.weight.T padded with zero columns >= P
    out_ref  : VMEM (TB, H)    lanes 0..P-1 = softmax weights, lane P = kld
    """
    P = NUM_PATCHES
    H = HIDDEN

    sigma = sm_ref[0]
    mean = sm_ref[1]

    # --- Gaussian target over patch positions, full lane width. Padded lanes
    # get a ~-inf logit so they carry exactly zero probability mass.
    # NOTE: torch adds eps = 1e-41 which is subnormal f32 (flushed to 0 on
    # TPU); we instead guard the normalizer with a normal-f32 floor.
    lane = lax.broadcasted_iota(jnp.int32, (1, H), 1)
    pos = lane.astype(jnp.float32)
    z = (pos - mean) / sigma
    log_g = jnp.where(lane < P, -0.5 * z * z, NEG)                 # (1, H)
    g = jnp.exp(log_g)                                             # 0 in pad lanes
    sum_g = jnp.maximum(jnp.sum(g, axis=-1, keepdims=True), 1e-30)
    gw = g / sum_g                                                 # (1, H)
    log_gw = log_g - jnp.log(sum_g)                                # analytic log(gw)

    # --- MLP: relu(x @ W1 + b1) @ W2t_pad + b2_pad
    b1 = vecs_ref[0:1, :]                                          # (1, H)
    b2 = vecs_ref[1:2, :]                                          # (1, H) (NEG in pad lanes)
    h = jnp.dot(x_ref[...], w1_ref[...],
                preferred_element_type=jnp.float32) + b1           # (TB, H)
    h = jnp.maximum(h, 0.0)
    y = jnp.dot(h, w2t_ref[...],
                preferred_element_type=jnp.float32) + b2           # (TB, H); pad lanes ~ NEG

    # --- Softmax over the (padded) patch lanes + analytic log-softmax.
    m = jnp.max(y, axis=-1, keepdims=True)
    e = jnp.exp(y - m)                                             # exactly 0 in pad lanes
    sum_e = jnp.sum(e, axis=-1, keepdims=True)
    nw = e / sum_e                                                 # (TB, H); 0 in pad lanes
    log_nw = (y - m) - jnp.log(sum_e)

    # kl_div(log(nw), gw, reduction='sum') = sum( gw * (log(gw) - log(nw)) ).
    # Padded lanes contribute gw == 0 exactly (no inf/nan).
    kld = jnp.sum(gw * (log_gw - log_nw), axis=-1, keepdims=True)  # (TB, 1)

    # --- Compose the packed output in registers; ONE unmasked full-width store.
    out_lane = lax.broadcasted_iota(jnp.int32, out_ref.shape, 1)
    out_ref[...] = jnp.where(out_lane == P, kld, nw)


def prepare_params(w1, b1, w2, b2):
    """One-time parameter packing into kernel layout (done at init, not per call).

    w1: (P, H) = torch fc.weight.T ; b1: (H,)
    w2: (P, H) = torch output.weight (native out x in) ; b2: (P,)
    """
    P, H = NUM_PATCHES, HIDDEN
    vecs = jnp.zeros((8, H), jnp.float32)
    vecs = vecs.at[0, :].set(b1.astype(jnp.float32))
    b2_pad = jnp.full((H,), NEG, jnp.float32).at[:P].set(b2.astype(jnp.float32))
    vecs = vecs.at[1, :].set(b2_pad)
    w2t_pad = jnp.zeros((H, H), jnp.float32).at[:, :P].set(w2.astype(jnp.float32).T)
    return {"vecs": vecs, "w1": w1.astype(jnp.float32), "w2t": w2t_pad}


def learnable_importance_weights(params, x, sigma, mean):
    """x: (B, P) per-patch scores (B multiple of TB). Returns (nw (B,P), kld (B,))."""
    P, H = NUM_PATCHES, HIDDEN
    B = x.shape[0]
    assert B % TB == 0, "batch must be a multiple of TB"

    sm = jnp.stack([jnp.asarray(sigma, jnp.float32),
                    jnp.asarray(mean, jnp.float32)])               # (2,) -> SMEM

    cost = pl.CostEstimate(
        flops=2 * B * (P * H + H * H),
        transcendentals=B * 2 * H + 2 * H,
        bytes_accessed=(2 + B * P + 8 * H + P * H + H * H + B * H) * 4,
    )

    grid_spec = pltpu.PrefetchScalarGridSpec(
        num_scalar_prefetch=0,
        grid=(B // TB,),
        in_specs=[
            pl.BlockSpec(memory_space=pltpu.MemorySpace.SMEM),      # [sigma, mean]
            pl.BlockSpec((TB, P), lambda i: (i, 0)),                # x tile
            pl.BlockSpec((8, H), lambda i: (0, 0)),                 # packed biases
            pl.BlockSpec((P, H), lambda i: (0, 0)),                 # w1
            pl.BlockSpec((H, H), lambda i: (0, 0)),                 # padded w2^T
        ],
        out_specs=pl.BlockSpec((TB, H), lambda i: (i, 0)),
    )

    out = pl.pallas_call(
        liw_kernel,
        out_shape=jax.ShapeDtypeStruct((B, H), jnp.float32),
        grid_spec=grid_spec,
        compiler_params=pltpu.CompilerParams(
            dimension_semantics=("parallel",)),
        cost_estimate=cost,
    )(sm, x.astype(jnp.float32), params["vecs"], params["w1"], params["w2t"])

    nw = out[:, :P]
    kld = out[:, P]
    return nw, kld


liw_forward = jax.jit(learnable_importance_weights)


def reference(x, sigma, mean, w1, b1, w2, b2):
    """Pure-JAX reference matching the torch module (batched over rows of x)."""
    P = w2.shape[0]
    pos = jnp.arange(P, dtype=jnp.float32)
    eps = 1e-41
    g = jnp.exp(-0.5 * ((pos - mean) / sigma) ** 2) + eps
    gw = g / jnp.sum(g)
    h = jnp.maximum(x @ w1 + b1, 0.0)
    y = h @ w2.T + b2
    nw = jax.nn.softmax(y, axis=-1)
    kld = jnp.sum(gw * (jnp.log(gw) - jnp.log(nw)), axis=-1)
    return nw, kld


if __name__ == "__main__":
    P, H, B = NUM_PATCHES, HIDDEN, 16
    key = jax.random.PRNGKey(0)
    k_x, k_w1, k_b1, k_w2, k_b2 = jax.random.split(key, 5)

    # Per-patch score vectors (batched) and the learned sigma/mean scalars.
    x = jax.random.normal(k_x, (B, P), dtype=jnp.float32)
    sigma = 2.0
    mean = (P - 1) / 2.0

    # nn.Linear-style deterministic init: U(-1/sqrt(fan_in), 1/sqrt(fan_in)).
    bnd1 = 1.0 / jnp.sqrt(P)
    w1 = jax.random.uniform(k_w1, (P, H), jnp.float32, -bnd1, bnd1)   # fc.weight.T
    b1 = jax.random.uniform(k_b1, (H,), jnp.float32, -bnd1, bnd1)
    bnd2 = 1.0 / jnp.sqrt(H)
    w2 = jax.random.uniform(k_w2, (P, H), jnp.float32, -bnd2, bnd2)   # output.weight (torch layout)
    b2 = jax.random.uniform(k_b2, (P,), jnp.float32, -bnd2, bnd2)

    params = prepare_params(w1, b1, w2, b2)   # one-time packing

    nw, kld = liw_forward(params, x, sigma, mean)
    jax.block_until_ready((nw, kld))

    nw_ref, kld_ref = reference(x, sigma, mean, w1, b1, w2, b2)
    assert nw.shape == (B, P) and kld.shape == (B,)
    assert jnp.allclose(nw, nw_ref, rtol=1e-3, atol=1e-5), "new_weights mismatch"
    assert jnp.allclose(kld, kld_ref, rtol=1e-3, atol=1e-4), "kld mismatch"

    print("KERNEL_OK")
</pallas_src>

<mosaic_0001>
module attributes {stable_mosaic.version = 11 : i64} {
  func.func @liw_kernel(%arg0: i32, %arg1: memref<2xf32, #tpu.memory_space<smem>>, %arg2: memref<8x16xf32, #tpu.memory_space<vmem>>, %arg3: memref<8x128xf32, #tpu.memory_space<vmem>>, %arg4: memref<16x128xf32, #tpu.memory_space<vmem>>, %arg5: memref<128x128xf32, #tpu.memory_space<vmem>>, %arg6: memref<8x128xf32, #tpu.memory_space<vmem>>) attributes {dimension_semantics = [#tpu.dimension_semantics<parallel>], iteration_bounds = array<i64: 2>, scalar_prefetch = 0 : i64, scratch_operands = 0 : i64, tpu.core_type = #tpu.core_type<tc>, window_params = [{transform_indices = @transform_0, window_bounds = array<i64: 2>}, {transform_indices = @transform_1, window_bounds = array<i64: 8, 16>}, {pipeline_mode = #tpu.pipeline_mode<synchronous>, transform_indices = @transform_2, window_bounds = array<i64: 8, 128>}, {pipeline_mode = #tpu.pipeline_mode<synchronous>, transform_indices = @transform_3, window_bounds = array<i64: 16, 128>}, {pipeline_mode = #tpu.pipeline_mode<synchronous>, transform_indices = @transform_4, window_bounds = array<i64: 128, 128>}, {transform_indices = @transform_5, window_bounds = array<i64: 8, 128>}]} {
    %c0 = arith.constant 0 : index
    %0 = memref.load %arg1[%c0] : memref<2xf32, #tpu.memory_space<smem>>
    %c1 = arith.constant 1 : index
    %1 = memref.load %arg1[%c1] : memref<2xf32, #tpu.memory_space<smem>>
    %2 = tpu.iota {dimensions = array<i32: 1>} : vector<1x128xi32>
    %3 = arith.sitofp %2 : vector<1x128xi32> to vector<1x128xf32>
    %4 = vector.broadcast %1 : f32 to vector<1x128xf32>
    %5 = arith.subf %3, %4 : vector<1x128xf32>
    %6 = vector.broadcast %0 : f32 to vector<1x128xf32>
    %7 = arith.divf %5, %6 : vector<1x128xf32>
    %c16_i32 = arith.constant 16 : i32
    %8 = vector.broadcast %c16_i32 : i32 to vector<1x128xi32>
    %9 = arith.cmpi slt, %2, %8 : vector<1x128xi32>
    %cst = arith.constant -5.000000e-01 : f32
    %10 = vector.broadcast %cst : f32 to vector<1x128xf32>
    %11 = arith.mulf %10, %7 : vector<1x128xf32>
    %12 = arith.mulf %11, %7 : vector<1x128xf32>
    %cst_0 = arith.constant -1.000000e+30 : f32
    %13 = vector.broadcast %cst_0 : f32 to vector<1x128xf32>
    %14 = arith.select %9, %12, %13 : vector<1x128xi1>, vector<1x128xf32>
    %15 = math.exp %14 : vector<1x128xf32>
    %cst_1 = arith.constant dense<0.000000e+00> : vector<1xf32>
    %16 = vector.multi_reduction <add>, %15, %cst_1 [1] : vector<1x128xf32> to vector<1xf32>
    %17 = vector.shape_cast %16 : vector<1xf32> to vector<1x1xf32>
    %cst_2 = arith.constant 1.000000e-30 : f32
    %18 = vector.broadcast %cst_2 : f32 to vector<1x1xf32>
    %19 = arith.maximumf %17, %18 : vector<1x1xf32>
    %20 = vector.broadcast %19 : vector<1x1xf32> to vector<1x128xf32>
    %21 = arith.divf %15, %20 : vector<1x128xf32>
    %22 = math.log %19 : vector<1x1xf32>
    %23 = vector.broadcast %22 : vector<1x1xf32> to vector<1x128xf32>
    %24 = arith.subf %14, %23 : vector<1x128xf32>
    %c0_3 = arith.constant 0 : index
    %c0_4 = arith.constant 0 : index
    %25 = vector.load %arg3[%c0_3, %c0_4] : memref<8x128xf32, #tpu.memory_space<vmem>>, vector<1x128xf32>
    %c1_5 = arith.constant 1 : index
    %c0_6 = arith.constant 0 : index
    %26 = vector.load %arg3[%c1_5, %c0_6] : memref<8x128xf32, #tpu.memory_space<vmem>>, vector<1x128xf32>
    %c0_7 = arith.constant 0 : index
    %c0_8 = arith.constant 0 : index
    %27 = vector.load %arg2[%c0_7, %c0_8] : memref<8x16xf32, #tpu.memory_space<vmem>>, vector<8x16xf32>
    %c0_9 = arith.constant 0 : index
    %c0_10 = arith.constant 0 : index
    %28 = vector.load %arg4[%c0_9, %c0_10] : memref<16x128xf32, #tpu.memory_space<vmem>>, vector<16x128xf32>
    %cst_11 = arith.constant dense<0.000000e+00> : vector<8x128xf32>
    %29 = tpu.matmul %27, %28, %cst_11 {dimension_numbers = #tpu.dot_dimension_numbers<[1], [0], [0], [1], [0, 0, 1, 1], [], []>} : vector<8x16xf32>, vector<16x128xf32>, vector<8x128xf32> -> vector<8x128xf32>
    %30 = vector.broadcast %25 : vector<1x128xf32> to vector<8x128xf32>
    %31 = arith.addf %29, %30 : vector<8x128xf32>
    %cst_12 = arith.constant 0.000000e+00 : f32
    %32 = vector.broadcast %cst_12 : f32 to vector<8x128xf32>
    %33 = arith.maximumf %31, %32 : vector<8x128xf32>
    %c0_13 = arith.constant 0 : index
    %c0_14 = arith.constant 0 : index
    %34 = vector.load %arg5[%c0_13, %c0_14] : memref<128x128xf32, #tpu.memory_space<vmem>>, vector<128x128xf32>
    %cst_15 = arith.constant dense<0.000000e+00> : vector<8x128xf32>
    %35 = tpu.matmul %33, %34, %cst_15 {dimension_numbers = #tpu.dot_dimension_numbers<[1], [0], [0], [1], [0, 0, 1, 1], [], []>} : vector<8x128xf32>, vector<128x128xf32>, vector<8x128xf32> -> vector<8x128xf32>
    %36 = vector.broadcast %26 : vector<1x128xf32> to vector<8x128xf32>
    %37 = arith.addf %35, %36 : vector<8x128xf32>
    %cst_16 = arith.constant dense<0xFF800000> : vector<8xf32>
    %38 = vector.multi_reduction <maximumf>, %37, %cst_16 [1] : vector<8x128xf32> to vector<8xf32>
    %39 = vector.shape_cast %38 : vector<8xf32> to vector<8x1xf32>
    %40 = vector.broadcast %39 : vector<8x1xf32> to vector<8x128xf32>
    %41 = arith.subf %37, %40 : vector<8x128xf32>
    %42 = math.exp %41 : vector<8x128xf32>
    %cst_17 = arith.constant dense<0.000000e+00> : vector<8xf32>
    %43 = vector.multi_reduction <add>, %42, %cst_17 [1] : vector<8x128xf32> to vector<8xf32>
    %44 = vector.shape_cast %43 : vector<8xf32> to vector<8x1xf32>
    %45 = vector.broadcast %44 : vector<8x1xf32> to vector<8x128xf32>
    %46 = arith.divf %42, %45 : vector<8x128xf32>
    %47 = vector.broadcast %39 : vector<8x1xf32> to vector<8x128xf32>
    %48 = arith.subf %37, %47 : vector<8x128xf32>
    %49 = math.log %44 : vector<8x1xf32>
    %50 = vector.broadcast %49 : vector<8x1xf32> to vector<8x128xf32>
    %51 = arith.subf %48, %50 : vector<8x128xf32>
    %52 = vector.broadcast %24 : vector<1x128xf32> to vector<8x128xf32>
    %53 = arith.subf %52, %51 : vector<8x128xf32>
    %54 = vector.broadcast %21 : vector<1x128xf32> to vector<8x128xf32>
    %55 = arith.mulf %54, %53 : vector<8x128xf32>
    %cst_18 = arith.constant dense<0.000000e+00> : vector<8xf32>
    %56 = vector.multi_reduction <add>, %55, %cst_18 [1] : vector<8x128xf32> to vector<8xf32>
    %57 = vector.shape_cast %56 : vector<8xf32> to vector<8x1xf32>
    %58 = tpu.iota {dimensions = array<i32: 1>} : vector<8x128xi32>
    %c16_i32_19 = arith.constant 16 : i32
    %59 = vector.broadcast %c16_i32_19 : i32 to vector<8x128xi32>
    %60 = arith.cmpi eq, %58, %59 : vector<8x128xi32>
    %61 = vector.shape_cast %57 : vector<8x1xf32> to vector<8x1xf32>
    %62 = vector.broadcast %61 : vector<8x1xf32> to vector<8x128xf32>
    %63 = arith.select %60, %62, %46 : vector<8x128xi1>, vector<8x128xf32>
    %c0_20 = arith.constant 0 : index
    %c0_21 = arith.constant 0 : index
    %64 = vector.load %arg6[%c0_20, %c0_21] : memref<8x128xf32, #tpu.memory_space<vmem>>, vector<8x128xf32>
    tpu.vector_store %arg6[%c0_20, %c0_21], %63 {strides = array<i32>} : memref<8x128xf32, #tpu.memory_space<vmem>>, vector<8x128xf32>,
    return
  }
  func.func @transform_0(%arg0: i32) -> i32 {
    %c0_i32 = arith.constant 0 : i32
    %c0_i32_0 = arith.constant 0 : i32
    return %c0_i32 : i32
  }
  func.func @transform_1(%arg0: i32) -> (i32, i32) {
    %c0_i32 = arith.constant 0 : i32
    %c0_i32_0 = arith.constant 0 : i32
    return %arg0, %c0_i32 : i32, i32
  }
  func.func @transform_2(%arg0: i32) -> (i32, i32) {
    %c0_i32 = arith.constant 0 : i32
    %c0_i32_0 = arith.constant 0 : i32
    %c0_i32_1 = arith.constant 0 : i32
    return %c0_i32, %c0_i32_0 : i32, i32
  }
  func.func @transform_3(%arg0: i32) -> (i32, i32) {
    %c0_i32 = arith.constant 0 : i32
    %c0_i32_0 = arith.constant 0 : i32
    %c0_i32_1 = arith.constant 0 : i32
    return %c0_i32, %c0_i32_0 : i32, i32
  }
  func.func @transform_4(%arg0: i32) -> (i32, i32) {
    %c0_i32 = arith.constant 0 : i32
    %c0_i32_0 = arith.constant 0 : i32
    %c0_i32_1 = arith.constant 0 : i32
    return %c0_i32, %c0_i32_0 : i32, i32
  }
  func.func @transform_5(%arg0: i32) -> (i32, i32) {
    %c0_i32 = arith.constant 0 : i32
    %c0_i32_0 = arith.constant 0 : i32
    return %arg0, %c0_i32 : i32, i32
  }
}

</mosaic_0001>

<llo_original>
// kernel: learnable_importance_weights.1
$region0: #{learnable_importance_weights.1}
  #allocation0 [shape = 'u32[]', space=smem, size = 0x4, offset = 0x4, fixed_abs, tag = 'smem constant byte address 0x4 - core index']
  #allocation1 [shape = 'u32[144,128]{1,0:T(1,128)}', space=vmem, size = 0x12000, scoped, tag = 'internal scratch']
  %s0 = inlined_call_operand.vmem [shape: f32[2], index: 0, kind: input, shape index: {}]
  %s1 = inlined_call_operand.vmem [shape: f32[16,16], index: 1, kind: input, shape index: {}]
  %s2 = inlined_call_operand.vmem [shape: f32[8,128], index: 2, kind: input, shape index: {}]
  %s3 = inlined_call_operand.hbm [shape: f32[16,128], index: 3, kind: input, shape index: {}]
  %s4 = inlined_call_operand.hbm [shape: f32[128,128], index: 4, kind: input, shape index: {}]
  %s5 = inlined_call_operand.vmem [shape: f32[16,128], index: 5, kind: output, shape index: {}]
  %s6 = sld [smem:[#allocation0]]
  $region65: #{learnable_importance_weights.1} parent=0
    _
  %s8 = ssub.s32 1, %s6
  %s9 = scalar_select 0, %s8, %s6
  $region1: #{learnable_importance_weights.1} parent=0
    #allocation2 [shape = 'u8[512]{0}', space=smem, size = 0x200, scoped, tag = 'input window, operand 0, single buffered']
    #allocation3 [shape = 's32[2]{0}', space=sflag, size = 0x8, scoped, tag = 'scoped memory for learnable_importance_weights.1']
    #allocation4 [shape = 's32[2]{0}', space=sflag, size = 0x8, scoped, tag = 'scoped memory for learnable_importance_weights.1']
    #allocation5 [shape = 'u8[8192]{0}', space=vmem, size = 0x2000, scoped, tag = 'input window, operand 3, single buffered']
    #allocation6 [shape = 'u8[65536]{0}', space=vmem, size = 0x10000, scoped, tag = 'input window, operand 4, single buffered']
    #allocation7 [shape = 's32[1]{0}', space=sflag, size = 0x4, scoped, tag = 'scoped memory for learnable_importance_weights.1']
    %10 = vsyncpa [#allocation4], 0
    %11 = vsyncpa [#allocation3], 0
    %12 = vsyncpa [#allocation7], 0
    loop: start=0, step=1, limit=4
    $region2: #{learnable_importance_weights.1} parent=1 // loop_pre_header
      _
    $region3: #{learnable_importance_weights.1} parent=1 // loop_header
      %s14 = sphi 0, %s18
      %p15 = scmp.ge.s32.totalorder %s14, 4
      %s22 = sphi 0, %s22
      %s24 = sphi 0, %s22
      %s25 = sphi 0, %s24
      %s39 = sphi 0, %s25
      %s45 = sphi 0, %s47
      %s48 = sphi 0, %s45
      %s49 = sphi 0, %s48
      %s65 = sphi 0, %s49
      %s69 = sphi 0, %s69
      %s71 = sphi 0, %s69
      %s72 = sphi 0, %s71
      %s86 = sphi 0, %s72
      %s90 = sphi 0, %s90
      %s92 = sphi 0, %s90
      %s93 = sphi 0, %s92
      %s107 = sphi 0, %s93
      %s111 = sphi 0, %s111
      %s113 = sphi 0, %s111
      %s114 = sphi 0, %s113
      %s128 = sphi 0, %s114
      %s134 = sphi 0, %s136
      %s137 = sphi 0, %s134
      %s138 = sphi 0, %s137
      %s154 = sphi 0, %s138
    $region4: #{learnable_importance_weights.1} parent=1 // loop_header_branch
      %17 = sbr.rel (%p15) target = $region8
    $region5: #{learnable_importance_weights.1} parent=1 // loop_body
      %s19 = ssub.s32 %s14, 1
      %s20 = ssub.s32 %s14, 2
      %s21 = sadd.s32 %s14, 1
      %s23 = sadd.s32 %s22, 1
      %p26 = scmp.eq.s32.totalorder %s14, 1
      %p27 = scmp.ne.s32.totalorder %s22, %s24
      %p28 = scmp.eq.s32.totalorder %s14, 0
      %p29 = por %p27, %p28
      %p30 = scmp.ne.s32.totalorder %s22, %s24
      %p31 = scmp.eq.s32.totalorder %s19, 1
      %p32 = por %p30, %p31
      %p33 = scmp.ne.s32.totalorder %s24, %s25
      %p34 = scmp.eq.s32.totalorder %s19, 0
      %p35 = por %p33, %p34
      %p36 = scmp.ne.s32.totalorder %s24, %s25
      %p37 = scmp.eq.s32.totalorder %s20, 1
      %p38 = por %p36, %p37
      %p40 = scmp.ne.s32.totalorder %s25, %s39
      %p41 = scmp.eq.s32.totalorder %s20, 0
      %p42 = por %p40, %p41
      %s43 = ssub.s32 %s14, %s21
      %p44 = scmp.eq.s32.totalorder %s43, 0
      %s46 = sadd.s32 %s45, 1
      %s47 = scalar_select %p44, %s45, %s46
      %p50 = pneg %p44
      %p51 = scmp.eq.s32.totalorder %s14, 1
      %p52 = por %p50, %p51
      %p53 = scmp.ne.s32.totalorder %s45, %s48
      %p54 = scmp.eq.s32.totalorder %s14, 0
      %p55 = por %p53, %p54
      %p56 = scmp.ne.s32.totalorder %s45, %s48
      %p57 = scmp.eq.s32.totalorder %s19, 1
      %p58 = por %p56, %p57
      %p59 = scmp.ne.s32.totalorder %s48, %s49
      %p60 = scmp.eq.s32.totalorder %s19, 0
      %p61 = por %p59, %p60
      %p62 = scmp.ne.s32.totalorder %s48, %s49
      %p63 = scmp.eq.s32.totalorder %s20, 1
      %p64 = por %p62, %p63
      %p66 = scmp.ne.s32.totalorder %s49, %s65
      %p67 = scmp.eq.s32.totalorder %s20, 0
      %p68 = por %p66, %p67
      %s70 = sadd.s32 %s69, 1
      %p73 = scmp.eq.s32.totalorder %s14, 1
      %p74 = scmp.ne.s32.totalorder %s69, %s71
      %p75 = scmp.eq.s32.totalorder %s14, 0
      %p76 = por %p74, %p75
      %p77 = scmp.ne.s32.totalorder %s69, %s71
      %p78 = scmp.eq.s32.totalorder %s19, 1
      %p79 = por %p77, %p78
      %p80 = scmp.ne.s32.totalorder %s71, %s72
      %p81 = scmp.eq.s32.totalorder %s19, 0
      %p82 = por %p80, %p81
      %p83 = scmp.ne.s32.totalorder %s71, %s72
      %p84 = scmp.eq.s32.totalorder %s20, 1
      %p85 = por %p83, %p84
      %p87 = scmp.ne.s32.totalorder %s72, %s86
      %p88 = scmp.eq.s32.totalorder %s20, 0
      %p89 = por %p87, %p88
      %s91 = sadd.s32 %s90, 1
      %p94 = scmp.eq.s32.totalorder %s14, 1
      %p95 = scmp.ne.s32.totalorder %s90, %s92
      %p96 = scmp.eq.s32.totalorder %s14, 0
      %p97 = por %p95, %p96
      %p98 = scmp.ne.s32.totalorder %s90, %s92
      %p99 = scmp.eq.s32.totalorder %s19, 1
      %p100 = por %p98, %p99
      %p101 = scmp.ne.s32.totalorder %s92, %s93
      %p102 = scmp.eq.s32.totalorder %s19, 0
      %p103 = por %p101, %p102
      %p104 = scmp.ne.s32.totalorder %s92, %s93
      %p105 = scmp.eq.s32.totalorder %s20, 1
      %p106 = por %p104, %p105
      %p108 = scmp.ne.s32.totalorder %s93, %s107
      %p109 = scmp.eq.s32.totalorder %s20, 0
      %p110 = por %p108, %p109
      %s112 = sadd.s32 %s111, 1
      %p115 = scmp.eq.s32.totalorder %s14, 1
      %p116 = scmp.ne.s32.totalorder %s111, %s113
      %p117 = scmp.eq.s32.totalorder %s14, 0
      %p118 = por %p116, %p117
      %p119 = scmp.ne.s32.totalorder %s111, %s113
      %p120 = scmp.eq.s32.totalorder %s19, 1
      %p121 = por %p119, %p120
      %p122 = scmp.ne.s32.totalorder %s113, %s114
      %p123 = scmp.eq.s32.totalorder %s19, 0
      %p124 = por %p122, %p123
      %p125 = scmp.ne.s32.totalorder %s113, %s114
      %p126 = scmp.eq.s32.totalorder %s20, 1
      %p127 = por %p125, %p126
      %p129 = scmp.ne.s32.totalorder %s114, %s128
      %p130 = scmp.eq.s32.totalorder %s20, 0
      %p131 = por %p129, %p130
      %s132 = ssub.s32 %s14, %s21
      %p133 = scmp.eq.s32.totalorder %s132, 0
      %s135 = sadd.s32 %s134, 1
      %s136 = scalar_select %p133, %s134, %s135
      %p139 = pneg %p133
      %p140 = scmp.eq.s32.totalorder %s14, 1
      %p141 = por %p139, %p140
      %p142 = scmp.ne.s32.totalorder %s134, %s137
      %p143 = scmp.eq.s32.totalorder %s14, 0
      %p144 = por %p142, %p143
      %p145 = scmp.ne.s32.totalorder %s134, %s137
      %p146 = scmp.eq.s32.totalorder %s19, 1
      %p147 = por %p145, %p146
      %p148 = scmp.ne.s32.totalorder %s137, %s138
      %p149 = scmp.eq.s32.totalorder %s19, 0
      %p150 = por %p148, %p149
      %p151 = scmp.ne.s32.totalorder %s137, %s138
      %p152 = scmp.eq.s32.totalorder %s20, 1
      %p153 = por %p151, %p152
      %p155 = scmp.ne.s32.totalorder %s138, %s154
      %p156 = scmp.eq.s32.totalorder %s20, 0
      %p157 = por %p155, %p156
      %p158 = scmp.le.s32.totalorder 1, %s14
      %p159 = scmp.lt.s32.totalorder %s14, 3
      %p160 = pnand %p158, %p159
      %p161 = pneg %p160
      // Predicated region
      $region9: #{learnable_importance_weights.1} parent=5 // pred_check
        _
      $region10: #{learnable_importance_weights.1} parent=5 // pred_check_branch
        %163 = sbr.rel (%p160) target = $region12
      $region11: #{learnable_importance_weights.1} parent=5 // pred_region
        %s164 = ssub.s32 %s14, 1
        // Predicated region
        $region13: #{learnable_importance_weights.1} parent=11 // pred_check
          %p165 = pneg %p35
        $region14: #{learnable_importance_weights.1} parent=11 // pred_check_branch
          %167 = sbr.rel (%p165) target = $region16
        $region15: #{learnable_importance_weights.1} parent=11 // pred_region
          %s169 = ssub.s32 16, 16
          %170 = vsyncadd [#allocation4], %s169
          %s172 = sshll.u32 %s0, 4
          %s173 = int_to_ptr.vmem [resolvable:$true] %s172
          %175 = dma.vmem_to_smem %s173, 16, [#allocation2], [#allocation4]
        $region16: #{learnable_importance_weights.1} parent=11 // pred_fallthru
          _
        // Predicated region
        $region17: #{learnable_importance_weights.1} parent=11 // pred_check
          %p176 = pneg %p82
        $region18: #{learnable_importance_weights.1} parent=11 // pred_check_branch
          %178 = sbr.rel (%p176) target = $region20
        $region19: #{learnable_importance_weights.1} parent=11 // pred_region
          _
        $region20: #{learnable_importance_weights.1} parent=11 // pred_fallthru
          _
        // Predicated region
        $region21: #{learnable_importance_weights.1} parent=11 // pred_check
          %p179 = pneg %p103
        $region22: #{learnable_importance_weights.1} parent=11 // pred_check_branch
          %181 = sbr.rel (%p179) target = $region24
        $region23: #{learnable_importance_weights.1} parent=11 // pred_region
          %s183 = ssub.s32 256, 256
          %184 = vsyncadd [#allocation3], %s183
          %s185 = sshll.u32 [#allocation5], 4
          %s186 = int_to_ptr.vmem [resolvable:$true] %s185
          %191 = dma.hbm_to_vmem [thread:$0]  %s3, 256, %s186, [#allocation3], 128, 128, 8
        $region24: #{learnable_importance_weights.1} parent=11 // pred_fallthru
          _
        // Predicated region
        $region25: #{learnable_importance_weights.1} parent=11 // pred_check
          %p192 = pneg %p124
        $region26: #{learnable_importance_weights.1} parent=11 // pred_check_branch
          %194 = sbr.rel (%p192) target = $region28
        $region27: #{learnable_importance_weights.1} parent=11 // pred_region
          %s196 = ssub.s32 2048, 2048
          %197 = vsyncadd [#allocation7], %s196
          %s198 = sshll.u32 [#allocation6], 4
          %s199 = int_to_ptr.vmem [resolvable:$true] %s198
          %204 = dma.hbm_to_vmem [thread:$0]  %s4, 2048, %s199, [#allocation7], 128, 128, 8
        $region28: #{learnable_importance_weights.1} parent=11 // pred_fallthru
          _
      $region12: #{learnable_importance_weights.1} parent=5 // pred_fallthru
        _
      %p205 = scmp.lt.s32.totalorder %s14, 2
      // Predicated region
      $region29: #{learnable_importance_weights.1} parent=5 // pred_check
        %p206 = pneg %p205
      $region30: #{learnable_importance_weights.1} parent=5 // pred_check_branch
        %208 = sbr.rel (%p206) target = $region32
      $region31: #{learnable_importance_weights.1} parent=5 // pred_region
        // Predicated region
        $region33: #{learnable_importance_weights.1} parent=31 // pred_check
          %p209 = pneg %p55
        $region34: #{learnable_importance_weights.1} parent=31 // pred_check_branch
          %211 = sbr.rel (%p209) target = $region36
        $region35: #{learnable_importance_weights.1} parent=31 // pred_region
          %p212 = scmp.lt.s32.totalorder %s14, 1
          %s213 = scalar_select %p212, %s14, 1
          %s214 = smul.addr %s213, 8
          %s215 = scalar_lea.vmem %s1, %s214
        $region36: #{learnable_importance_weights.1} parent=31 // pred_fallthru
          _
      $region32: #{learnable_importance_weights.1} parent=5 // pred_fallthru
        _
      %p216 = scmp.le.s32.totalorder 1, %s14
      %p217 = scmp.lt.s32.totalorder %s14, 3
      %p218 = pnand %p216, %p217
      %p219 = pneg %p218
      // Predicated region
      $region37: #{learnable_importance_weights.1} parent=5 // pred_check
        _
      $region38: #{learnable_importance_weights.1} parent=5 // pred_check_branch
        %221 = sbr.rel (%p218) target = $region40
      $region39: #{learnable_importance_weights.1} parent=5 // pred_region
        %s222 = ssub.s32 %s14, 1
        // Predicated region
        $region41: #{learnable_importance_weights.1} parent=39 // pred_check
          %p223 = pneg %p35
        $region42: #{learnable_importance_weights.1} parent=39 // pred_check_branch
          %225 = sbr.rel (%p223) target = $region44
        $region43: #{learnable_importance_weights.1} parent=39 // pred_region
          %226 = dma.done [#allocation4], 16
        $region44: #{learnable_importance_weights.1} parent=39 // pred_fallthru
          _
        // Predicated region
        $region45: #{learnable_importance_weights.1} parent=39 // pred_check
          %p227 = pneg %p103
        $region46: #{learnable_importance_weights.1} parent=39 // pred_check_branch
          %229 = sbr.rel (%p227) target = $region48
        $region47: #{learnable_importance_weights.1} parent=39 // pred_region
          %230 = dma.done [#allocation3], 256
        $region48: #{learnable_importance_weights.1} parent=39 // pred_fallthru
          _
        // Predicated region
        $region49: #{learnable_importance_weights.1} parent=39 // pred_check
          %p231 = pneg %p124
        $region50: #{learnable_importance_weights.1} parent=39 // pred_check_branch
          %233 = sbr.rel (%p231) target = $region52
        $region51: #{learnable_importance_weights.1} parent=39 // pred_region
          %234 = dma.done [#allocation7], 2048
        $region52: #{learnable_importance_weights.1} parent=39 // pred_fallthru
          _
        %235 = sfence
        %p236 = pneg %p35
        %p237 = pneg %p32
        %p238 = scmp.lt.s32.totalorder %s19, 1
        %s239 = scalar_select %p238, %s19, 1
        %s240 = smul.addr %s239, 8
        %s241 = scalar_lea.vmem %s1, %s240
        %p242 = pneg %p61
        %p243 = pneg %p58
        %p244 = pneg %p82
        %p245 = pneg %p79
        %p246 = pneg %p103
        %p247 = pneg %p100
        %p248 = pneg %p124
        %p249 = pneg %p121
        %p250 = pneg %p150
        %p251 = pneg %p147
        %p252 = scmp.lt.s32.totalorder %s19, 1
        %s253 = scalar_select %p252, %s19, 1
        %s254 = smul.addr %s253, 8
        %s255 = scalar_lea.vmem %s5, %s254
        %p256 = scmp.lt.s32.totalorder %s19, 1
        %s257 = scalar_select %p256, %s19, 1
        %s258 = smul.addr %s257, 8
        %s259 = scalar_lea.vmem %s1, %s258
        %p260 = scmp.lt.s32.totalorder %s19, 1
        %s261 = scalar_select %p260, %s19, 1
        %s262 = smul.addr %s261, 8
        %s263 = scalar_lea.vmem %s5, %s262
        %s264 = sld [smem:[#allocation2]]
        %s265 = sld [smem:[#allocation2 + $0x1]]
        %v266 = vlaneseq
        %v267 = vand.u32 %v266, 127
        %v268 = vcvt.s32.f32 %v267
        %v269 = vstv %s265
        %v270 = vsub.f32 %v268, %v269
        %v271 = vstv %s264
        %v272 = vrcp.pop %v271
        %v273 = vmul.f32 %v270, %v272
        %vm274 = vcmp.lt.s32.totalorder %v267, 16
        %v275 = vmul.f32 %v273, -0.5
        %v276 = vmul.f32 %v275, %v273
        %v277 = vsel %vm274, %v276, -1e+30
        %v278 = vmul.f32 %v277, 1.442695
        %v279 = vpow.pop %v278
        %280 = vadd.xlane.f32.xlu0 %v279
        %v281 = vpop.xlane.xlu0 %280
        %v282 = vmax.f32 %v281, 1e-30
        %v283 = vrcp.pop %v282
        %v284 = vmul.f32 %v279, %v283
        %v285 = vlog2.pop %v282
        %v286 = vmul.f32 %v285, 0.6931472
        %v287 = vsub.f32 %v277, %v286
        %v288 = vld [vmem:[%s2] sm:$0x1]
        %v289 = vld [vmem:[%s2 + $0x1] sm:$0x1]
        %v290 = vld [vmem:[%s259] sm:$0xff]
        %v291 = vld [vmem:[#allocation5] sm:$0xff]
        %v292 = vld [vmem:[#allocation5 + $0x8] sm:$0xff]
        %v293 = vlaneseq
        %v294 = vshrl.u32 %v293, 7
        %v295 = vsub.s32 0, %v294
        %v296 = vrot.slane %v288, %v295
        %vm297 = vcmask 130048
        %v299 = vsel %vm297, %v290, 0
        %301 = vmatprep.subr.mxu0 0.0
        %302 = vmatpush1.msra.mxu0 %v291
        %303 = vmatprep.subr.mxu0 0.0
        %304 = vmatpush1.msra.mxu0 %v292
        %305 = vmatprep.subr.mxu0 0.0
        %306 = vmatpush1.msra.mxu0 0.0
        %307 = vmatprep.subr.mxu0 0.0
        %308 = vmatpush1.msra.mxu0 0.0
        %309 = vmatprep.subr.mxu0 0.0
        %310 = vmatpush1.msra.mxu0 0.0
        %311 = vmatprep.subr.mxu0 0.0
        %312 = vmatpush1.msra.mxu0 0.0
        %313 = vmatprep.subr.mxu0 0.0
        %314 = vmatpush1.msra.mxu0 0.0
        %315 = vmatprep.subr.mxu0 0.0
        %316 = vmatpush1.msra.mxu0 0.0
        %317 = vmatprep.subr.mxu0 0.0
        %318 = vmatpush1.msra.mxu0 0.0
        %319 = vmatprep.subr.mxu0 0.0
        %320 = vmatpush1.msra.mxu0 0.0
        %321 = vmatprep.subr.mxu0 0.0
        %322 = vmatpush1.msra.mxu0 0.0
        %323 = vmatprep.subr.mxu0 0.0
        %324 = vmatpush1.msra.mxu0 0.0
        %325 = vmatprep.subr.mxu0 0.0
        %326 = vmatpush1.msra.mxu0 0.0
        %327 = vmatprep.subr.mxu0 0.0
        %328 = vmatpush1.msra.mxu0 0.0
        %329 = vmatprep.subr.mxu0 0.0
        %330 = vmatpush1.msra.mxu0 0.0
        %331 = vmatprep.subr.mxu0 0.0
        %332 = vmatpush1.msra.mxu0 0.0
        %333 = vmatprep.subr.mxu0 0.0
        %334 = vmatpush1.msra.mxu0 0.0
        %335 = vmatprep.subr.mxu0 0.0
        %336 = vmatpush1.msra.mxu0 0.0
        %337 = vmatprep.subr.mxu0 0.0
        %338 = vmatpush1.msra.mxu0 0.0
        %339 = vmatprep.subr.mxu0 0.0
        %340 = vmatpush1.msra.mxu0 0.0
        %341 = vmatprep.subr.mxu0 0.0
        %342 = vmatpush1.msra.mxu0 0.0
        %343 = vmatprep.subr.mxu0 0.0
        %344 = vmatpush1.msra.mxu0 0.0
        %345 = vmatprep.subr.mxu0 0.0
        %346 = vmatpush1.msra.mxu0 0.0
        %347 = vmatprep.subr.mxu0 0.0
        %348 = vmatpush1.msra.mxu0 0.0
        %349 = vmatprep.subr.mxu0 0.0
        %350 = vmatpush1.msra.mxu0 0.0
        %351 = vmatprep.subr.mxu0 0.0
        %352 = vmatpush1.msra.mxu0 0.0
        %353 = vmatprep.subr.mxu0 0.0
        %354 = vmatpush1.msra.mxu0 0.0
        %355 = vmatprep.subr.mxu0 0.0
        %356 = vmatpush1.msra.mxu0 0.0
        %357 = vmatprep.subr.mxu0 0.0
        %358 = vmatpush1.msra.mxu0 0.0
        %359 = vmatprep.subr.mxu0 0.0
        %360 = vmatpush1.msra.mxu0 0.0
        %361 = vmatprep.subr.mxu0 0.0
        %362 = vmatpush1.msra.mxu0 0.0
        %363 = vmatprep.subr.mxu0 0.0
        %364 = vmatpush1.msra.mxu0 0.0
        %365 = vmatprep.mubr.f32.mxu0 0.0
        %366 = vmatmul.mubr.f32.gmra.mrb[0].mxu0 %v299
        %v367 = vpop.f32.mrb[0].mxu0
        %v368 = vadd.f32 %v296, %v367
        %v369 = vpop.f32.mrb[0].mxu0
        %370 = vdwg.mxu0
        %v371 = vmax.f32 %v368, 0.0
        %v372 = vld [vmem:[#allocation6] sm:$0xff]
        %v373 = vld [vmem:[#allocation6 + $0x8] sm:$0xff]
        %v374 = vld [vmem:[#allocation6 + $0x10] sm:$0xff]
        %v375 = vld [vmem:[#allocation6 + $0x18] sm:$0xff]
        %v376 = vld [vmem:[#allocation6 + $0x20] sm:$0xff]
        %v377 = vld [vmem:[#allocation6 + $0x28] sm:$0xff]
        %v378 = vld [vmem:[#allocation6 + $0x30] sm:$0xff]
        %v379 = vld [vmem:[#allocation6 + $0x38] sm:$0xff]
        %v380 = vld [vmem:[#allocation6 + $0x40] sm:$0xff]
        %v381 = vld [vmem:[#allocation6 + $0x48] sm:$0xff]
        %v382 = vld [vmem:[#allocation6 + $0x50] sm:$0xff]
        %v383 = vld [vmem:[#allocation6 + $0x58] sm:$0xff]
        %v384 = vld [vmem:[#allocation6 + $0x60] sm:$0xff]
        %v385 = vld [vmem:[#allocation6 + $0x68] sm:$0xff]
        %v386 = vld [vmem:[#allocation6 + $0x70] sm:$0xff]
        %v387 = vld [vmem:[#allocation6 + $0x78] sm:$0xff]
        %v388 = vlaneseq
        %v389 = vshrl.u32 %v388, 7
        %v390 = vsub.s32 0, %v389
        %v391 = vrot.slane %v289, %v390
        %392 = vmatprep.subr.mxu0 0.0
        %393 = vmatpush1.msra.mxu0 %v372
        %394 = vmatprep.subr.mxu0 0.0
        %395 = vmatpush1.msra.mxu0 %v373
        %396 = vmatprep.subr.mxu0 0.0
        %397 = vmatpush1.msra.mxu0 %v374
        %398 = vmatprep.subr.mxu0 0.0
        %399 = vmatpush1.msra.mxu0 %v375
        %400 = vmatprep.subr.mxu0 0.0
        %401 = vmatpush1.msra.mxu0 %v376
        %402 = vmatprep.subr.mxu0 0.0
        %403 = vmatpush1.msra.mxu0 %v377
        %404 = vmatprep.subr.mxu0 0.0
        %405 = vmatpush1.msra.mxu0 %v378
        %406 = vmatprep.subr.mxu0 0.0
        %407 = vmatpush1.msra.mxu0 %v379
        %408 = vmatprep.subr.mxu0 0.0
        %409 = vmatpush1.msra.mxu0 %v380
        %410 = vmatprep.subr.mxu0 0.0
        %411 = vmatpush1.msra.mxu0 %v381
        %412 = vmatprep.subr.mxu0 0.0
        %413 = vmatpush1.msra.mxu0 %v382
        %414 = vmatprep.subr.mxu0 0.0
        %415 = vmatpush1.msra.mxu0 %v383
        %416 = vmatprep.subr.mxu0 0.0
        %417 = vmatpush1.msra.mxu0 %v384
        %418 = vmatprep.subr.mxu0 0.0
        %419 = vmatpush1.msra.mxu0 %v385
        %420 = vmatprep.subr.mxu0 0.0
        %421 = vmatpush1.msra.mxu0 %v386
        %422 = vmatprep.subr.mxu0 0.0
        %423 = vmatpush1.msra.mxu0 %v387
        %424 = vmatprep.subr.mxu0 0.0
        %425 = vmatpush1.msra.mxu0 0.0
        %426 = vmatprep.subr.mxu0 0.0
        %427 = vmatpush1.msra.mxu0 0.0
        %428 = vmatprep.subr.mxu0 0.0
        %429 = vmatpush1.msra.mxu0 0.0
        %430 = vmatprep.subr.mxu0 0.0
        %431 = vmatpush1.msra.mxu0 0.0
        %432 = vmatprep.subr.mxu0 0.0
        %433 = vmatpush1.msra.mxu0 0.0
        %434 = vmatprep.subr.mxu0 0.0
        %435 = vmatpush1.msra.mxu0 0.0
        %436 = vmatprep.subr.mxu0 0.0
        %437 = vmatpush1.msra.mxu0 0.0
        %438 = vmatprep.subr.mxu0 0.0
        %439 = vmatpush1.msra.mxu0 0.0
        %440 = vmatprep.subr.mxu0 0.0
        %441 = vmatpush1.msra.mxu0 0.0
        %442 = vmatprep.subr.mxu0 0.0
        %443 = vmatpush1.msra.mxu0 0.0
        %444 = vmatprep.subr.mxu0 0.0
        %445 = vmatpush1.msra.mxu0 0.0
        %446 = vmatprep.subr.mxu0 0.0
        %447 = vmatpush1.msra.mxu0 0.0
        %448 = vmatprep.subr.mxu0 0.0
        %449 = vmatpush1.msra.mxu0 0.0
        %450 = vmatprep.subr.mxu0 0.0
        %451 = vmatpush1.msra.mxu0 0.0
        %452 = vmatprep.subr.mxu0 0.0
        %453 = vmatpush1.msra.mxu0 0.0
        %454 = vmatprep.subr.mxu0 0.0
        %455 = vmatpush1.msra.mxu0 0.0
        %456 = vmatprep.mubr.f32.mxu0 0.0
        %457 = vmatmul.mubr.f32.gmra.mrb[0].mxu0 %v371
        %v458 = vpop.f32.mrb[0].mxu0
        %v459 = vadd.f32 %v391, %v458
        %v460 = vpop.f32.mrb[0].mxu0
        %461 = vdwg.mxu0
        %462 = vmax.xlane.f32.xlu0 %v459
        %v463 = vpop.xlane.xlu0 %462
        %v464 = vsub.f32 %v459, %v463
        %v465 = vmul.f32 %v464, 1.442695
        %v466 = vpow.pop %v465
        %467 = vadd.xlane.f32.xlu0 %v466
        %v468 = vpop.xlane.xlu0 %467
        %v469 = vrcp.pop %v468
        %v470 = vmul.f32 %v466, %v469
        %v471 = vlog2.pop %v468
        %v472 = vmul.f32 %v471, 0.6931472
        %v473 = vsub.f32 %v464, %v472
        %v474 = vsub.f32 %v287, %v473
        %v475 = vmul.f32 %v284, %v474
        %476 = vadd.xlane.f32.xlu0 %v475
        %v477 = vpop.xlane.xlu0 %476
        %vm478 = vcmp.eq.s32.totalorder %v267, 16
        %v479 = vsel %vm478, %v477, %v470
        %480 = vst [vmem:[%s263] sm:$0xff] %v479
        %p481 = scmp.lt.s32.totalorder %s19, 1
        %s482 = scalar_select %p481, %s19, 1
        %s483 = smul.addr %s482, 8
        %s484 = scalar_lea.vmem %s5, %s483
        // Predicated region
        $region53: #{learnable_importance_weights.1} parent=39 // pred_check
          %p485 = pneg %p147
        $region54: #{learnable_importance_weights.1} parent=39 // pred_check_branch
          %487 = sbr.rel (%p485) target = $region56
        $region55: #{learnable_importance_weights.1} parent=39 // pred_region
          _
        $region56: #{learnable_importance_weights.1} parent=39 // pred_fallthru
          _
      $region40: #{learnable_importance_weights.1} parent=5 // pred_fallthru
        _
      %p488 = scmp.le.s32.totalorder 2, %s14
      // Predicated region
      $region57: #{learnable_importance_weights.1} parent=5 // pred_check
        %p489 = pneg %p488
      $region58: #{learnable_importance_weights.1} parent=5 // pred_check_branch
        %491 = sbr.rel (%p489) target = $region60
      $region59: #{learnable_importance_weights.1} parent=5 // pred_region
        %s492 = ssub.s32 %s14, 2
        // Predicated region
        $region61: #{learnable_importance_weights.1} parent=59 // pred_check
          %p493 = pneg %p153
        $region62: #{learnable_importance_weights.1} parent=59 // pred_check_branch
          %495 = sbr.rel (%p493) target = $region64
        $region63: #{learnable_importance_weights.1} parent=59 // pred_region
          %p496 = scmp.lt.s32.totalorder %s20, 1
          %s497 = scalar_select %p496, %s20, 1
          %s498 = smul.addr %s497, 8
          %s499 = scalar_lea.vmem %s5, %s498
        $region64: #{learnable_importance_weights.1} parent=59 // pred_fallthru
          _
      $region60: #{learnable_importance_weights.1} parent=5 // pred_fallthru
        _
    $region6: #{learnable_importance_weights.1} parent=1 // loop_footer
      %s18 = sadd.s32 1, %s14
    $region7: #{learnable_importance_weights.1} parent=1 // loop_footer_branch
      %13 = sbr.rel target = $region3
    $region8: #{learnable_importance_weights.1} parent=1 // loop_exit
      _
    %500 = vsyncpa [#allocation3], 1
    %s501 = scalar_lea.sflag [#allocation3], 1
    %502 = vsyncpa %s501, 1
    %503 = vsyncpa [#allocation7], 1
    %504 = vsyncpa [#allocation4], 1
    %s505 = scalar_lea.sflag [#allocation4], 1
    %506 = vsyncpa %s505, 1

</llo_original>
